<compile_context>
chip_gen: v5e
topology: v5e:2x2
jax: 0.10.0
libtpu: 0.0.40
codegen_flags: <defaults>
</compile_context>

<pallas_src>
import math
import numpy as np
import jax
import jax.numpy as jnp
from jax.experimental import pallas as pl
from jax.experimental.pallas import tpu as pltpu


# ---------------- beta schedule (setup glue, plain numpy, float64 like torch) ----
def cosine_beta_schedule(timesteps, s=0.008):
    steps = timesteps + 1
    x = np.linspace(0, timesteps, steps, dtype=np.float64)
    alphas_cumprod = np.cos((x / timesteps + s) / (1 + s) * math.pi * 0.5) ** 2
    alphas_cumprod = alphas_cumprod / alphas_cumprod[0]
    betas = 1 - alphas_cumprod[1:] / alphas_cumprod[:-1]
    return np.clip(betas, 0, 0.999)


def _pick_tile_hw(HW, target=16384):
    """Largest HW tile that is a multiple of 128, divides HW, and is <= target.
    Falls back to the full extent when HW is not a multiple of 128 (a block dim
    equal to the full array dim is always legal; stores just become masked)."""
    if HW % 128 != 0:
        return HW
    t = min(target, HW)
    t -= t % 128
    while HW % t != 0:
        t -= 128
    return t


# ---------------- fused Pallas kernel ----------------
def _make_kernel(C, inv_chw):
    def diffusion_fwd_kernel(img_ref, noise_ref, coef_ref, w_ref, bias_ref, loss_ref):
        j = pl.program_id(1)  # hw-block index (reduction axis)

        # Blocks arrive in the natural (C, TILE_HW) layout; upcast after the DMA so
        # bf16 inputs are accepted with f32 math (VPU on v5e has no bf16 path).
        img = img_ref[...].astype(jnp.float32)      # (C, TILE_HW)
        noise = noise_ref[...].astype(jnp.float32)  # (C, TILE_HW)

        # Per-batch scalar coefficients, one tiny (C, 4) tile per batch element.
        coef = coef_ref[...].astype(jnp.float32)    # (C, 4)
        a2 = coef[:, 0:1]     # 2 * sqrt_alphas_cumprod[t_b]
        cb = coef[:, 1:2]     # sqrt_one_minus_alphas_cumprod[t_b]
        off = coef[:, 2:3]    # -sqrt_alphas_cumprod[t_b]
        tb = coef[:, 3:4]     # 0.1 * t_b / num_timesteps

        # q_sample with normalize folded into the coefficients:
        #   x_t = ca*(2*img - 1) + cb*noise = (2*ca)*img + cb*noise - ca
        x_t = a2 * img + cb * noise + off           # (C, TILE_HW)

        # Synthetic denoiser: 1x1 conv == channel mixing.  C=4 -> unrolled VPU
        # outer-product FMAs.  Fold the L1 target's "- noise" into the init.
        w = w_ref[...].astype(jnp.float32)          # (C, C)
        bias = bias_ref[...].astype(jnp.float32)    # (C, 1)
        acc = (bias + tb) - noise                   # (C,1) - (C,TILE) -> (C,TILE)
        for k in range(C):                          # static unroll (C=4)
            acc = acc + w[:, k:k + 1] * x_t[k:k + 1, :]

        # Per-block L1 partial, accumulated into the resident per-batch output block.
        part = jnp.sum(jnp.abs(acc), keepdims=True)              # (1, 1)

        @pl.when(j == 0)
        def _():
            loss_ref[...] = jnp.zeros_like(loss_ref)

        loss_ref[...] += part

        @pl.when(j == pl.num_programs(1) - 1)
        def _():
            loss_ref[...] = loss_ref[...] * inv_chw              # mean over (C, H*W)

    return diffusion_fwd_kernel


def gaussian_diffusion_forward(img, mask, t, noise, w, bias,
                               sqrt_alphas_cumprod, sqrt_one_minus_alphas_cumprod,
                               num_timesteps, *, tile_hw=None):
    """img/noise: (B, C, H, W) NCHW (f32 or bf16); mask: (B, H*W) bool; t: (B,) int32."""
    B, C, H, W = img.shape
    HW = H * W
    # Synthetic model exposes `final_layer`, so the mask/patchify branch of loss_fn
    # is not taken; mask is only an (ignored) model input here.
    # TODO(synk): no-final_layer branch (patch rearrange + boolean-mask gather) not
    # implemented in-kernel.
    del mask

    # Natural layout, free reshape — no transposes, no extra HBM pass.
    img_r = img.reshape(B, C, HW)
    noise_r = noise.reshape(B, C, HW)

    # Per-batch scalar coefficients as a tiny (B, C, 4) array (B*64 bytes), instead
    # of a broadcast (4, B*HW) slab.
    ca = sqrt_alphas_cumprod[t].astype(jnp.float32)                 # (B,)
    cbv = sqrt_one_minus_alphas_cumprod[t].astype(jnp.float32)      # (B,)
    tbv = 0.1 * t.astype(jnp.float32) / float(num_timesteps)        # (B,)
    coef = jnp.stack([2.0 * ca, cbv, -ca, tbv], axis=-1)            # (B, 4)
    coef = jnp.broadcast_to(coef[:, None, :], (B, C, 4)).astype(jnp.float32)

    if tile_hw is None:
        tile_hw = _pick_tile_hw(HW)
    assert HW % tile_hw == 0, (HW, tile_hw)
    assert tile_hw == HW or tile_hw % 128 == 0, tile_hw
    num_j = HW // tile_hw

    kernel = _make_kernel(C, 1.0 / float(C * HW))

    per_batch = pl.pallas_call(
        kernel,
        grid=(B, num_j),
        out_shape=jax.ShapeDtypeStruct((B, 1, 1), jnp.float32),
        in_specs=[
            pl.BlockSpec((None, C, tile_hw), lambda b, j: (b, 0, j)),   # img block
            pl.BlockSpec((None, C, tile_hw), lambda b, j: (b, 0, j)),   # noise block
            pl.BlockSpec((None, C, 4), lambda b, j: (b, 0, 0)),         # per-batch coefs
            pl.BlockSpec((C, C), lambda b, j: (0, 0)),                  # model weight
            pl.BlockSpec((C, 1), lambda b, j: (0, 0)),                  # model bias
        ],
        out_specs=pl.BlockSpec((None, 1, 1), lambda b, j: (b, 0, 0)),   # per-batch loss
        compiler_params=pltpu.CompilerParams(
            dimension_semantics=("parallel", "arbitrary")),
    )(img_r, noise_r, coef, w, bias)

    # Final (tiny) batch mean.  mean_b(mean_chw|.|): every batch element has the
    # same C*H*W count, so this exactly matches the PyTorch reduction.
    return {"loss": jnp.mean(per_batch)}


if __name__ == "__main__":
    B, C, H, W = 2, 4, 16, 16
    T = 1000

    key = jax.random.PRNGKey(0)
    k_img, k_t, k_noise, k_w, k_b = jax.random.split(key, 5)

    # diffusion buffers (cosine schedule, default config)
    betas = cosine_beta_schedule(T)
    alphas = 1.0 - betas
    alphas_cumprod = np.cumprod(alphas)
    sqrt_ac = jnp.asarray(np.sqrt(alphas_cumprod), dtype=jnp.float32)
    sqrt_omac = jnp.asarray(np.sqrt(1.0 - alphas_cumprod), dtype=jnp.float32)

    # deterministic inputs / synthetic model parameters
    img = jax.random.uniform(k_img, (B, C, H, W), jnp.float32)        # NCHW, [0, 1]
    mask = jnp.zeros((B, H * W), dtype=jnp.bool_)
    t = jax.random.randint(k_t, (B,), 0, T).astype(jnp.int32)
    noise = jax.random.normal(k_noise, (B, C, H, W), jnp.float32)
    w = jax.random.normal(k_w, (C, C), jnp.float32) / math.sqrt(C)
    bias = 0.01 * jax.random.normal(k_b, (C, 1), jnp.float32)

    # tile_hw=128 so the toy shape exercises the multi-block HW accumulation
    # (grid = (2, 2)); production sizes use the default ~16K-lane tiles.
    out = gaussian_diffusion_forward(img, mask, t, noise, w, bias,
                                     sqrt_ac, sqrt_omac, T, tile_hw=128)
    loss = jax.block_until_ready(out["loss"])

    # pure-JAX reference for correctness (mirrors the PyTorch forward exactly)
    ca_r = sqrt_ac[t][:, None, None, None]
    cb_r = sqrt_omac[t][:, None, None, None]
    x_t_ref = ca_r * (img * 2.0 - 1.0) + cb_r * noise
    x_flat = x_t_ref.reshape(B, C, H * W)
    mo_ref = (jnp.einsum("ij,bjk->bik", w, x_flat)
              + bias[None]
              + 0.1 * (t.astype(jnp.float32) / T)[:, None, None])
    per_b = jnp.mean(jnp.abs(mo_ref - noise.reshape(B, C, H * W)), axis=(1, 2))
    loss_ref = jnp.mean(per_b)

    assert np.allclose(np.asarray(loss), np.asarray(loss_ref), rtol=1e-5, atol=1e-5), \
        (float(loss), float(loss_ref))

    print("KERNEL_OK")
</pallas_src>

<mosaic_0001>
module attributes {stable_mosaic.version = 11 : i64} {
  func.func @diffusion_fwd_kernel(%arg0: i32, %arg1: i32, %arg2: memref<1x4x128xf32, #tpu.memory_space<vmem>>, %arg3: memref<1x4x128xf32, #tpu.memory_space<vmem>>, %arg4: memref<1x4x4xf32, #tpu.memory_space<vmem>>, %arg5: memref<4x4xf32, #tpu.memory_space<vmem>>, %arg6: memref<4x1xf32, #tpu.memory_space<vmem>>, %arg7: memref<1x1x1xf32, #tpu.memory_space<vmem>>) attributes {dimension_semantics = [#tpu.dimension_semantics<parallel>, #tpu.dimension_semantics<arbitrary>], iteration_bounds = array<i64: 2, 2>, scalar_prefetch = 0 : i64, scratch_operands = 0 : i64, tpu.core_type = #tpu.core_type<tc>, window_params = [{transform_indices = @transform_0, window_bounds = array<i64: 1, 4, 128>}, {transform_indices = @transform_1, window_bounds = array<i64: 1, 4, 128>}, {transform_indices = @transform_2, window_bounds = array<i64: 1, 4, 4>}, {pipeline_mode = #tpu.pipeline_mode<synchronous>, transform_indices = @transform_3, window_bounds = array<i64: 4, 4>}, {pipeline_mode = #tpu.pipeline_mode<synchronous>, transform_indices = @transform_4, window_bounds = array<i64: 4, 1>}, {transform_indices = @transform_5, window_bounds = array<i64: 1, 1, 1>}]} {
    %c0 = arith.constant 0 : index
    %c0_0 = arith.constant 0 : index
    %c0_1 = arith.constant 0 : index
    %0 = vector.load %arg2[%c0, %c0_0, %c0_1] : memref<1x4x128xf32, #tpu.memory_space<vmem>>, vector<1x4x128xf32>
    %1 = vector.shape_cast %0 : vector<1x4x128xf32> to vector<4x128xf32>
    %c0_2 = arith.constant 0 : index
    %c0_3 = arith.constant 0 : index
    %c0_4 = arith.constant 0 : index
    %2 = vector.load %arg3[%c0_2, %c0_3, %c0_4] : memref<1x4x128xf32, #tpu.memory_space<vmem>>, vector<1x4x128xf32>
    %3 = vector.shape_cast %2 : vector<1x4x128xf32> to vector<4x128xf32>
    %c0_5 = arith.constant 0 : index
    %c0_6 = arith.constant 0 : index
    %c0_7 = arith.constant 0 : index
    %4 = vector.load %arg4[%c0_5, %c0_6, %c0_7] : memref<1x4x4xf32, #tpu.memory_space<vmem>>, vector<1x4x4xf32>
    %5 = vector.shape_cast %4 : vector<1x4x4xf32> to vector<4x4xf32>
    %6 = vector.extract_strided_slice %5 {offsets = [0, 0], sizes = [4, 1], strides = [1, 1]} : vector<4x4xf32> to vector<4x1xf32>
    %7 = vector.extract_strided_slice %5 {offsets = [0, 1], sizes = [4, 1], strides = [1, 1]} : vector<4x4xf32> to vector<4x1xf32>
    %8 = vector.extract_strided_slice %5 {offsets = [0, 2], sizes = [4, 1], strides = [1, 1]} : vector<4x4xf32> to vector<4x1xf32>
    %9 = vector.extract_strided_slice %5 {offsets = [0, 3], sizes = [4, 1], strides = [1, 1]} : vector<4x4xf32> to vector<4x1xf32>
    %10 = vector.broadcast %6 : vector<4x1xf32> to vector<4x128xf32>
    %11 = arith.mulf %10, %1 : vector<4x128xf32>
    %12 = vector.broadcast %7 : vector<4x1xf32> to vector<4x128xf32>
    %13 = arith.mulf %12, %3 : vector<4x128xf32>
    %14 = arith.addf %11, %13 : vector<4x128xf32>
    %15 = vector.broadcast %8 : vector<4x1xf32> to vector<4x128xf32>
    %16 = arith.addf %14, %15 : vector<4x128xf32>
    %c0_8 = arith.constant 0 : index
    %c0_9 = arith.constant 0 : index
    %17 = vector.load %arg5[%c0_8, %c0_9] : memref<4x4xf32, #tpu.memory_space<vmem>>, vector<4x4xf32>
    %c0_10 = arith.constant 0 : index
    %c0_11 = arith.constant 0 : index
    %18 = vector.load %arg6[%c0_10, %c0_11] : memref<4x1xf32, #tpu.memory_space<vmem>>, vector<4x1xf32>
    %19 = arith.addf %18, %9 : vector<4x1xf32>
    %20 = vector.broadcast %19 : vector<4x1xf32> to vector<4x128xf32>
    %21 = arith.subf %20, %3 : vector<4x128xf32>
    %22 = vector.extract_strided_slice %17 {offsets = [0, 0], sizes = [4, 1], strides = [1, 1]} : vector<4x4xf32> to vector<4x1xf32>
    %23 = vector.extract_strided_slice %16 {offsets = [0, 0], sizes = [1, 128], strides = [1, 1]} : vector<4x128xf32> to vector<1x128xf32>
    %24 = vector.broadcast %22 : vector<4x1xf32> to vector<4x128xf32>
    %25 = vector.broadcast %23 : vector<1x128xf32> to vector<4x128xf32>
    %26 = arith.mulf %24, %25 : vector<4x128xf32>
    %27 = arith.addf %21, %26 : vector<4x128xf32>
    %28 = vector.extract_strided_slice %17 {offsets = [0, 1], sizes = [4, 1], strides = [1, 1]} : vector<4x4xf32> to vector<4x1xf32>
    %29 = vector.extract_strided_slice %16 {offsets = [1, 0], sizes = [1, 128], strides = [1, 1]} : vector<4x128xf32> to vector<1x128xf32>
    %30 = vector.broadcast %28 : vector<4x1xf32> to vector<4x128xf32>
    %31 = vector.broadcast %29 : vector<1x128xf32> to vector<4x128xf32>
    %32 = arith.mulf %30, %31 : vector<4x128xf32>
    %33 = arith.addf %27, %32 : vector<4x128xf32>
    %34 = vector.extract_strided_slice %17 {offsets = [0, 2], sizes = [4, 1], strides = [1, 1]} : vector<4x4xf32> to vector<4x1xf32>
    %35 = vector.extract_strided_slice %16 {offsets = [2, 0], sizes = [1, 128], strides = [1, 1]} : vector<4x128xf32> to vector<1x128xf32>
    %36 = vector.broadcast %34 : vector<4x1xf32> to vector<4x128xf32>
    %37 = vector.broadcast %35 : vector<1x128xf32> to vector<4x128xf32>
    %38 = arith.mulf %36, %37 : vector<4x128xf32>
    %39 = arith.addf %33, %38 : vector<4x128xf32>
    %40 = vector.extract_strided_slice %17 {offsets = [0, 3], sizes = [4, 1], strides = [1, 1]} : vector<4x4xf32> to vector<4x1xf32>
    %41 = vector.extract_strided_slice %16 {offsets = [3, 0], sizes = [1, 128], strides = [1, 1]} : vector<4x128xf32> to vector<1x128xf32>
    %42 = vector.broadcast %40 : vector<4x1xf32> to vector<4x128xf32>
    %43 = vector.broadcast %41 : vector<1x128xf32> to vector<4x128xf32>
    %44 = arith.mulf %42, %43 : vector<4x128xf32>
    %45 = arith.addf %39, %44 : vector<4x128xf32>
    %46 = math.absf %45 : vector<4x128xf32>
    %47 = vector.shape_cast %46 : vector<4x128xf32> to vector<1x4x128xf32>
    %cst = arith.constant dense<0.000000e+00> : vector<1xf32>
    %48 = vector.multi_reduction <add>, %47, %cst [1, 2] : vector<1x4x128xf32> to vector<1xf32>
    %49 = vector.shape_cast %48 : vector<1xf32> to vector<1x1x1xf32>
    %50 = vector.extract %49[0, 0, 0] : f32 from vector<1x1x1xf32>
    %51 = vector.broadcast %50 : f32 to vector<1x1xf32>
    %c0_i32 = arith.constant 0 : i32
    %52 = arith.cmpi eq, %arg1, %c0_i32 : i32
    %53 = arith.extui %52 : i1 to i32
    %c0_i32_12 = arith.constant 0 : i32
    %54 = arith.cmpi ne, %53, %c0_i32_12 : i32
    scf.if %54 {
      %cst_20 = arith.constant 0.000000e+00 : f32
      %64 = vector.broadcast %cst_20 : f32 to vector<1x1xf32>
      %c0_21 = arith.constant 0 : index
      %c0_22 = arith.constant 0 : index
      %c0_23 = arith.constant 0 : index
      %65 = vector.load %arg7[%c0_21, %c0_22, %c0_23] : memref<1x1x1xf32, #tpu.memory_space<vmem>>, vector<1x1x1xf32>
      %66 = vector.shape_cast %65 : vector<1x1x1xf32> to vector<1x1xf32>
      %67 = vector.shape_cast %64 : vector<1x1xf32> to vector<1x1x1xf32>
      tpu.vector_store %arg7[%c0_21, %c0_22, %c0_23], %67 {strides = array<i32>} : memref<1x1x1xf32, #tpu.memory_space<vmem>>, vector<1x1x1xf32>,
    } else {
    }
    %c0_13 = arith.constant 0 : index
    %c0_14 = arith.constant 0 : index
    %c0_15 = arith.constant 0 : index
    %55 = vector.load %arg7[%c0_13, %c0_14, %c0_15] : memref<1x1x1xf32, #tpu.memory_space<vmem>>, vector<1x1x1xf32>
    %56 = vector.shape_cast %55 : vector<1x1x1xf32> to vector<1x1xf32>
    %57 = arith.addf %56, %51 : vector<1x1xf32>
    %c0_16 = arith.constant 0 : index
    %c0_17 = arith.constant 0 : index
    %c0_18 = arith.constant 0 : index
    %58 = vector.load %arg7[%c0_16, %c0_17, %c0_18] : memref<1x1x1xf32, #tpu.memory_space<vmem>>, vector<1x1x1xf32>
    %59 = vector.shape_cast %58 : vector<1x1x1xf32> to vector<1x1xf32>
    %60 = vector.shape_cast %57 : vector<1x1xf32> to vector<1x1x1xf32>
    tpu.vector_store %arg7[%c0_16, %c0_17, %c0_18], %60 {strides = array<i32>} : memref<1x1x1xf32, #tpu.memory_space<vmem>>, vector<1x1x1xf32>,
    %c1_i32 = arith.constant 1 : i32
    %61 = arith.cmpi eq, %arg1, %c1_i32 : i32
    %62 = arith.extui %61 : i1 to i32
    %c0_i32_19 = arith.constant 0 : i32
    %63 = arith.cmpi ne, %62, %c0_i32_19 : i32
    scf.if %63 {
      %c0_20 = arith.constant 0 : index
      %c0_21 = arith.constant 0 : index
      %c0_22 = arith.constant 0 : index
      %64 = vector.load %arg7[%c0_20, %c0_21, %c0_22] : memref<1x1x1xf32, #tpu.memory_space<vmem>>, vector<1x1x1xf32>
      %65 = vector.shape_cast %64 : vector<1x1x1xf32> to vector<1x1xf32>
      %cst_23 = arith.constant 9.765625E-4 : f32
      %66 = vector.broadcast %cst_23 : f32 to vector<1x1xf32>
      %67 = arith.mulf %65, %66 : vector<1x1xf32>
      %c0_24 = arith.constant 0 : index
      %c0_25 = arith.constant 0 : index
      %c0_26 = arith.constant 0 : index
      %68 = vector.load %arg7[%c0_24, %c0_25, %c0_26] : memref<1x1x1xf32, #tpu.memory_space<vmem>>, vector<1x1x1xf32>
      %69 = vector.shape_cast %68 : vector<1x1x1xf32> to vector<1x1xf32>
      %70 = vector.shape_cast %67 : vector<1x1xf32> to vector<1x1x1xf32>
      tpu.vector_store %arg7[%c0_24, %c0_25, %c0_26], %70 {strides = array<i32>} : memref<1x1x1xf32, #tpu.memory_space<vmem>>, vector<1x1x1xf32>,
    } else {
    }
    return
  }
  func.func @transform_0(%arg0: i32, %arg1: i32) -> (i32, i32, i32) {
    %c0_i32 = arith.constant 0 : i32
    %c0_i32_0 = arith.constant 0 : i32
    return %arg0, %c0_i32, %arg1 : i32, i32, i32
  }
  func.func @transform_1(%arg0: i32, %arg1: i32) -> (i32, i32, i32) {
    %c0_i32 = arith.constant 0 : i32
    %c0_i32_0 = arith.constant 0 : i32
    return %arg0, %c0_i32, %arg1 : i32, i32, i32
  }
  func.func @transform_2(%arg0: i32, %arg1: i32) -> (i32, i32, i32) {
    %c0_i32 = arith.constant 0 : i32
    %c0_i32_0 = arith.constant 0 : i32
    %c0_i32_1 = arith.constant 0 : i32
    return %arg0, %c0_i32, %c0_i32_0 : i32, i32, i32
  }
  func.func @transform_3(%arg0: i32, %arg1: i32) -> (i32, i32) {
    %c0_i32 = arith.constant 0 : i32
    %c0_i32_0 = arith.constant 0 : i32
    %c0_i32_1 = arith.constant 0 : i32
    return %c0_i32, %c0_i32_0 : i32, i32
  }
  func.func @transform_4(%arg0: i32, %arg1: i32) -> (i32, i32) {
    %c0_i32 = arith.constant 0 : i32
    %c0_i32_0 = arith.constant 0 : i32
    %c0_i32_1 = arith.constant 0 : i32
    return %c0_i32, %c0_i32_0 : i32, i32
  }
  func.func @transform_5(%arg0: i32, %arg1: i32) -> (i32, i32, i32) {
    %c0_i32 = arith.constant 0 : i32
    %c0_i32_0 = arith.constant 0 : i32
    %c0_i32_1 = arith.constant 0 : i32
    return %arg0, %c0_i32, %c0_i32_0 : i32, i32, i32
  }
}

</mosaic_0001>

<llo_original>
// kernel: tpu_custom_call.1
$region0: #{tpu_custom_call.1}
  #allocation0 [shape = 'u32[]', space=smem, size = 0x4, offset = 0x4, fixed_abs, tag = 'smem constant byte address 0x4 - core index']
  #allocation1 [shape = 'u32[72,128]{1,0:T(1,128)}', space=vmem, size = 0x9000, scoped, tag = 'internal scratch']
  %s0 = inlined_call_operand.hbm [shape: f32[2,4,256], index: 0, kind: input, shape index: {}]
  %s1 = inlined_call_operand.hbm [shape: f32[2,4,256], index: 1, kind: input, shape index: {}]
  %s2 = inlined_call_operand.hbm [shape: f32[2,4,4], index: 2, kind: input, shape index: {}]
  %s3 = inlined_call_operand.vmem [shape: f32[4,4], index: 3, kind: input, shape index: {}]
  %s4 = inlined_call_operand.vmem [shape: f32[4,1], index: 4, kind: input, shape index: {}]
  %s5 = inlined_call_operand.vmem [shape: f32[2,1,1], index: 5, kind: output, shape index: {}]
  %s6 = sld [smem:[#allocation0]]
  $region73: #{tpu_custom_call.1} parent=0
    _
  %s8 = ssub.s32 1, %s6
  %s9 = scalar_select 0, %s8, %s6
  $region1: #{tpu_custom_call.1} parent=0
    #allocation2 [shape = 'u8[4096]{0}', space=vmem, size = 0x1000, scoped, tag = 'input window, operand 0']
    #allocation3 [shape = 's32[2]{0}', space=sflag, size = 0x8, scoped, tag = 'scoped memory for tpu_custom_call.1']
    #allocation4 [shape = 'u8[4096]{0}', space=vmem, size = 0x1000, scoped, tag = 'input window, operand 1']
    #allocation5 [shape = 's32[2]{0}', space=sflag, size = 0x8, scoped, tag = 'scoped memory for tpu_custom_call.1']
    #allocation6 [shape = 'u8[4096]{0}', space=vmem, size = 0x1000, scoped, tag = 'input window, operand 2']
    %10 = vsyncpa [#allocation3], 0
    %s11 = scalar_lea.sflag [#allocation3], 1
    %12 = vsyncpa %s11, 0
    %13 = vsyncpa [#allocation5], 0
    %s14 = scalar_lea.sflag [#allocation5], 1
    %15 = vsyncpa %s14, 0
    loop: start=0, step=1, limit=6
    $region2: #{tpu_custom_call.1} parent=1 // loop_pre_header
      _
    $region3: #{tpu_custom_call.1} parent=1 // loop_header
      %s17 = sphi 0, %s21
      %p18 = scmp.ge.s32.totalorder %s17, 6
      %s24 = sphi 0, %s36
      %s25 = sphi 0, %s32
      %s26 = sphi 0, %s24
      %s27 = sphi 0, %s25
      %s28 = sphi 0, %s26
      %s29 = sphi 0, %s27
      %s41 = sphi 0, %s43
      %s44 = sphi 0, %s41
      %s45 = sphi 0, %s44
      %s61 = sphi 0, %s45
      %s69 = sphi 0, %s71
      %s72 = sphi 0, %s69
      %s73 = sphi 0, %s72
      %s89 = sphi 0, %s73
      %s95 = sphi 0, %s97
      %s98 = sphi 0, %s95
      %s99 = sphi 0, %s98
      %s115 = sphi 0, %s99
      %s119 = sphi 0, %s119
      %s121 = sphi 0, %s119
      %s122 = sphi 0, %s121
      %s136 = sphi 0, %s122
      %s140 = sphi 0, %s140
      %s142 = sphi 0, %s140
      %s143 = sphi 0, %s142
      %s157 = sphi 0, %s143
      %s163 = sphi 0, %s165
      %s166 = sphi 0, %s163
      %s167 = sphi 0, %s166
      %s183 = sphi 0, %s167
    $region4: #{tpu_custom_call.1} parent=1 // loop_header_branch
      %20 = sbr.rel (%p18) target = $region8
    $region5: #{tpu_custom_call.1} parent=1 // loop_body
      %s22 = ssub.s32 %s17, 1
      %s23 = ssub.s32 %s17, 2
      %s30 = sadd.s32 1, %s25
      %p31 = scmp.ge.s32.totalorder %s30, 2
      %s32 = scalar_select %p31, 0, %s30
      %s33 = sadd.s32 1, %s24
      %s34 = scalar_select %p31, %s33, %s24
      %p35 = scmp.ge.s32.totalorder %s34, 2
      %s36 = scalar_select %p35, 0, %s34
      %s37 = ssub.s32 %s24, %s36
      %s38 = ssub.s32 %s25, %s32
      %s39 = sor.u32 %s37, %s38
      %p40 = scmp.eq.s32.totalorder %s39, 0
      %s42 = sadd.s32 %s41, 1
      %s43 = scalar_select %p40, %s41, %s42
      %p46 = pneg %p40
      %p47 = scmp.eq.s32.totalorder %s17, 3
      %p48 = por %p46, %p47
      %p49 = scmp.ne.s32.totalorder %s41, %s44
      %p50 = scmp.eq.s32.totalorder %s17, 0
      %p51 = por %p49, %p50
      %p52 = scmp.ne.s32.totalorder %s41, %s44
      %p53 = scmp.eq.s32.totalorder %s22, 3
      %p54 = por %p52, %p53
      %p55 = scmp.ne.s32.totalorder %s44, %s45
      %p56 = scmp.eq.s32.totalorder %s22, 0
      %p57 = por %p55, %p56
      %p58 = scmp.ne.s32.totalorder %s44, %s45
      %p59 = scmp.eq.s32.totalorder %s23, 3
      %p60 = por %p58, %p59
      %p62 = scmp.ne.s32.totalorder %s45, %s61
      %p63 = scmp.eq.s32.totalorder %s23, 0
      %p64 = por %p62, %p63
      %s65 = ssub.s32 %s24, %s36
      %s66 = ssub.s32 %s25, %s32
      %s67 = sor.u32 %s65, %s66
      %p68 = scmp.eq.s32.totalorder %s67, 0
      %s70 = sadd.s32 %s69, 1
      %s71 = scalar_select %p68, %s69, %s70
      %p74 = pneg %p68
      %p75 = scmp.eq.s32.totalorder %s17, 3
      %p76 = por %p74, %p75
      %p77 = scmp.ne.s32.totalorder %s69, %s72
      %p78 = scmp.eq.s32.totalorder %s17, 0
      %p79 = por %p77, %p78
      %p80 = scmp.ne.s32.totalorder %s69, %s72
      %p81 = scmp.eq.s32.totalorder %s22, 3
      %p82 = por %p80, %p81
      %p83 = scmp.ne.s32.totalorder %s72, %s73
      %p84 = scmp.eq.s32.totalorder %s22, 0
      %p85 = por %p83, %p84
      %p86 = scmp.ne.s32.totalorder %s72, %s73
      %p87 = scmp.eq.s32.totalorder %s23, 3
      %p88 = por %p86, %p87
      %p90 = scmp.ne.s32.totalorder %s73, %s89
      %p91 = scmp.eq.s32.totalorder %s23, 0
      %p92 = por %p90, %p91
      %s93 = ssub.s32 %s24, %s36
      %p94 = scmp.eq.s32.totalorder %s93, 0
      %s96 = sadd.s32 %s95, 1
      %s97 = scalar_select %p94, %s95, %s96
      %p100 = pneg %p94
      %p101 = scmp.eq.s32.totalorder %s17, 3
      %p102 = por %p100, %p101
      %p103 = scmp.ne.s32.totalorder %s95, %s98
      %p104 = scmp.eq.s32.totalorder %s17, 0
      %p105 = por %p103, %p104
      %p106 = scmp.ne.s32.totalorder %s95, %s98
      %p107 = scmp.eq.s32.totalorder %s22, 3
      %p108 = por %p106, %p107
      %p109 = scmp.ne.s32.totalorder %s98, %s99
      %p110 = scmp.eq.s32.totalorder %s22, 0
      %p111 = por %p109, %p110
      %p112 = scmp.ne.s32.totalorder %s98, %s99
      %p113 = scmp.eq.s32.totalorder %s23, 3
      %p114 = por %p112, %p113
      %p116 = scmp.ne.s32.totalorder %s99, %s115
      %p117 = scmp.eq.s32.totalorder %s23, 0
      %p118 = por %p116, %p117
      %s120 = sadd.s32 %s119, 1
      %p123 = scmp.eq.s32.totalorder %s17, 3
      %p124 = scmp.ne.s32.totalorder %s119, %s121
      %p125 = scmp.eq.s32.totalorder %s17, 0
      %p126 = por %p124, %p125
      %p127 = scmp.ne.s32.totalorder %s119, %s121
      %p128 = scmp.eq.s32.totalorder %s22, 3
      %p129 = por %p127, %p128
      %p130 = scmp.ne.s32.totalorder %s121, %s122
      %p131 = scmp.eq.s32.totalorder %s22, 0
      %p132 = por %p130, %p131
      %p133 = scmp.ne.s32.totalorder %s121, %s122
      %p134 = scmp.eq.s32.totalorder %s23, 3
      %p135 = por %p133, %p134
      %p137 = scmp.ne.s32.totalorder %s122, %s136
      %p138 = scmp.eq.s32.totalorder %s23, 0
      %p139 = por %p137, %p138
      %s141 = sadd.s32 %s140, 1
      %p144 = scmp.eq.s32.totalorder %s17, 3
      %p145 = scmp.ne.s32.totalorder %s140, %s142
      %p146 = scmp.eq.s32.totalorder %s17, 0
      %p147 = por %p145, %p146
      %p148 = scmp.ne.s32.totalorder %s140, %s142
      %p149 = scmp.eq.s32.totalorder %s22, 3
      %p150 = por %p148, %p149
      %p151 = scmp.ne.s32.totalorder %s142, %s143
      %p152 = scmp.eq.s32.totalorder %s22, 0
      %p153 = por %p151, %p152
      %p154 = scmp.ne.s32.totalorder %s142, %s143
      %p155 = scmp.eq.s32.totalorder %s23, 3
      %p156 = por %p154, %p155
      %p158 = scmp.ne.s32.totalorder %s143, %s157
      %p159 = scmp.eq.s32.totalorder %s23, 0
      %p160 = por %p158, %p159
      %s161 = ssub.s32 %s24, %s36
      %p162 = scmp.eq.s32.totalorder %s161, 0
      %s164 = sadd.s32 %s163, 1
      %s165 = scalar_select %p162, %s163, %s164
      %p168 = pneg %p162
      %p169 = scmp.eq.s32.totalorder %s17, 3
      %p170 = por %p168, %p169
      %p171 = scmp.ne.s32.totalorder %s163, %s166
      %p172 = scmp.eq.s32.totalorder %s17, 0
      %p173 = por %p171, %p172
      %p174 = scmp.ne.s32.totalorder %s163, %s166
      %p175 = scmp.eq.s32.totalorder %s22, 3
      %p176 = por %p174, %p175
      %p177 = scmp.ne.s32.totalorder %s166, %s167
      %p178 = scmp.eq.s32.totalorder %s22, 0
      %p179 = por %p177, %p178
      %p180 = scmp.ne.s32.totalorder %s166, %s167
      %p181 = scmp.eq.s32.totalorder %s23, 3
      %p182 = por %p180, %p181
      %p184 = scmp.ne.s32.totalorder %s167, %s183
      %p185 = scmp.eq.s32.totalorder %s23, 0
      %p186 = por %p184, %p185
      %p187 = scmp.le.s32.totalorder 1, %s17
      %p188 = scmp.lt.s32.totalorder %s17, 5
      %p189 = pnand %p187, %p188
      %p190 = pneg %p189
      // Predicated region
      $region9: #{tpu_custom_call.1} parent=5 // pred_check
        _
      $region10: #{tpu_custom_call.1} parent=5 // pred_check_branch
        %192 = sbr.rel (%p189) target = $region12
      $region11: #{tpu_custom_call.1} parent=5 // pred_region
        %s193 = ssub.s32 %s17, 1
        // Predicated region
        $region13: #{tpu_custom_call.1} parent=11 // pred_check
          %p194 = pneg %p132
        $region14: #{tpu_custom_call.1} parent=11 // pred_check_branch
          %196 = sbr.rel (%p194) target = $region16
        $region15: #{tpu_custom_call.1} parent=11 // pred_region
          _
        $region16: #{tpu_custom_call.1} parent=11 // pred_fallthru
          _
        // Predicated region
        $region17: #{tpu_custom_call.1} parent=11 // pred_check
          %p197 = pneg %p153
        $region18: #{tpu_custom_call.1} parent=11 // pred_check_branch
          %199 = sbr.rel (%p197) target = $region20
        $region19: #{tpu_custom_call.1} parent=11 // pred_region
          _
        $region20: #{tpu_custom_call.1} parent=11 // pred_fallthru
          _
      $region12: #{tpu_custom_call.1} parent=5 // pred_fallthru
        _
      %p200 = scmp.lt.s32.totalorder %s17, 4
      // Predicated region
      $region21: #{tpu_custom_call.1} parent=5 // pred_check
        %p201 = pneg %p200
      $region22: #{tpu_custom_call.1} parent=5 // pred_check_branch
        %203 = sbr.rel (%p201) target = $region24
      $region23: #{tpu_custom_call.1} parent=5 // pred_region
        // Predicated region
        $region25: #{tpu_custom_call.1} parent=23 // pred_check
          %p204 = pneg %p51
        $region26: #{tpu_custom_call.1} parent=23 // pred_check_branch
          %206 = sbr.rel (%p204) target = $region28
        $region27: #{tpu_custom_call.1} parent=23 // pred_region
          %s207 = sand.u32 %s41, 1
          %s208 = scalar_lea.sflag [#allocation3], %s207
          %s209 = sand.u32 %s41, 1
          %s210 = smul.addr %s209, 4
          %s211 = scalar_lea.vmem [#allocation2], %s210
          %213 = vsyncadd %s208, 0
          %s214 = smul.addr %s24, 2
          %s215 = sadd.s32 %s25, %s214
          %s216 = smul.addr %s215, 4
          %s217 = scalar_lea.hbm %s0, %s216
          %s219 = sshll.u32 %s217, 4
          %s220 = int_to_ptr.hbm [resolvable:$true] %s219
          %s221 = sshll.u32 %s211, 4
          %s222 = int_to_ptr.vmem [resolvable:$true] %s221
          %224 = dma.hbm_to_vmem [thread:$0]  %s220, 64, %s222, %s208
        $region28: #{tpu_custom_call.1} parent=23 // pred_fallthru
          _
        // Predicated region
        $region29: #{tpu_custom_call.1} parent=23 // pred_check
          %p225 = pneg %p79
        $region30: #{tpu_custom_call.1} parent=23 // pred_check_branch
          %227 = sbr.rel (%p225) target = $region32
        $region31: #{tpu_custom_call.1} parent=23 // pred_region
          %s228 = sand.u32 %s17, 1
          %s229 = scalar_lea.sflag [#allocation5], %s228
          %s230 = sand.u32 %s69, 1
          %s231 = smul.addr %s230, 4
          %s232 = scalar_lea.vmem [#allocation4], %s231
          %234 = vsyncadd %s229, 0
          %s235 = smul.addr %s24, 2
          %s236 = sadd.s32 %s25, %s235
          %s237 = smul.addr %s236, 4
          %s238 = scalar_lea.hbm %s1, %s237
          %s240 = sshll.u32 %s238, 4
          %s241 = int_to_ptr.hbm [resolvable:$true] %s240
          %s242 = sshll.u32 %s232, 4
          %s243 = int_to_ptr.vmem [resolvable:$true] %s242
          %245 = dma.hbm_to_vmem [thread:$0]  %s241, 64, %s243, %s229
        $region32: #{tpu_custom_call.1} parent=23 // pred_fallthru
          _
        // Predicated region
        $region33: #{tpu_custom_call.1} parent=23 // pred_check
          %p246 = pneg %p105
        $region34: #{tpu_custom_call.1} parent=23 // pred_check_branch
          %248 = sbr.rel (%p246) target = $region36
        $region35: #{tpu_custom_call.1} parent=23 // pred_region
          %s249 = sand.u32 %s17, 1
          %s250 = scalar_lea.sflag [#allocation5], %s249
          %s251 = sand.u32 %s95, 1
          %s252 = smul.addr %s251, 4
          %s253 = scalar_lea.vmem [#allocation6], %s252
          %255 = vsyncadd %s250, 0
          %s256 = smul.addr %s24, 4
          %s257 = scalar_lea.hbm %s2, %s256
          %s259 = sshll.u32 %s257, 4
          %s260 = int_to_ptr.hbm [resolvable:$true] %s259
          %s261 = sshll.u32 %s253, 4
          %s262 = int_to_ptr.vmem [resolvable:$true] %s261
          %264 = dma.hbm_to_vmem [thread:$0]  %s260, 64, %s262, %s250
        $region36: #{tpu_custom_call.1} parent=23 // pred_fallthru
          _
      $region24: #{tpu_custom_call.1} parent=5 // pred_fallthru
        _
      %p265 = scmp.le.s32.totalorder 1, %s17
      %p266 = scmp.lt.s32.totalorder %s17, 5
      %p267 = pnand %p265, %p266
      %p268 = pneg %p267
      // Predicated region
      $region37: #{tpu_custom_call.1} parent=5 // pred_check
        _
      $region38: #{tpu_custom_call.1} parent=5 // pred_check_branch
        %270 = sbr.rel (%p267) target = $region40
      $region39: #{tpu_custom_call.1} parent=5 // pred_region
        %s271 = ssub.s32 %s17, 1
        %s272 = sand.u32 %s44, 1
        %s273 = scalar_lea.sflag [#allocation3], %s272
        %s274 = sand.u32 %s44, 1
        %s275 = smul.addr %s274, 4
        %s276 = scalar_lea.vmem [#allocation2], %s275
        // Predicated region
        $region41: #{tpu_custom_call.1} parent=39 // pred_check
          %p277 = pneg %p57
        $region42: #{tpu_custom_call.1} parent=39 // pred_check_branch
          %279 = sbr.rel (%p277) target = $region44
        $region43: #{tpu_custom_call.1} parent=39 // pred_region
          %281 = dma.done %s273, 64
        $region44: #{tpu_custom_call.1} parent=39 // pred_fallthru
          _
        %s282 = sand.u32 %s22, 1
        %s283 = scalar_lea.sflag [#allocation5], %s282
        %s284 = sand.u32 %s72, 1
        %s285 = smul.addr %s284, 4
        %s286 = scalar_lea.vmem [#allocation4], %s285
        // Predicated region
        $region45: #{tpu_custom_call.1} parent=39 // pred_check
          %p287 = pneg %p85
        $region46: #{tpu_custom_call.1} parent=39 // pred_check_branch
          %289 = sbr.rel (%p287) target = $region48
        $region47: #{tpu_custom_call.1} parent=39 // pred_region
          %291 = dma.done %s283, 64
        $region48: #{tpu_custom_call.1} parent=39 // pred_fallthru
          _
        %s292 = sand.u32 %s22, 1
        %s293 = scalar_lea.sflag [#allocation5], %s292
        %s294 = sand.u32 %s98, 1
        %s295 = smul.addr %s294, 4
        %s296 = scalar_lea.vmem [#allocation6], %s295
        // Predicated region
        $region49: #{tpu_custom_call.1} parent=39 // pred_check
          %p297 = pneg %p111
        $region50: #{tpu_custom_call.1} parent=39 // pred_check_branch
          %299 = sbr.rel (%p297) target = $region52
        $region51: #{tpu_custom_call.1} parent=39 // pred_region
          %301 = dma.done %s293, 64
        $region52: #{tpu_custom_call.1} parent=39 // pred_fallthru
          _
        %s302 = sand.u32 %s44, 1
        %s303 = scalar_lea.sflag [#allocation3], %s302
        %s304 = sand.u32 %s44, 1
        %s305 = smul.addr %s304, 4
        %s306 = scalar_lea.vmem [#allocation2], %s305
        %p307 = pneg %p57
        %p308 = pneg %p54
        %s309 = sand.u32 %s22, 1
        %s310 = scalar_lea.sflag [#allocation5], %s309
        %s311 = sand.u32 %s72, 1
        %s312 = smul.addr %s311, 4
        %s313 = scalar_lea.vmem [#allocation4], %s312
        %p314 = pneg %p85
        %p315 = pneg %p82
        %s316 = sand.u32 %s22, 1
        %s317 = scalar_lea.sflag [#allocation5], %s316
        %s318 = sand.u32 %s98, 1
        %s319 = smul.addr %s318, 4
        %s320 = scalar_lea.vmem [#allocation6], %s319
        %p321 = pneg %p111
        %p322 = pneg %p108
        %p323 = pneg %p132
        %p324 = pneg %p129
        %p325 = pneg %p153
        %p326 = pneg %p150
        %p327 = pneg %p179
        %p328 = pneg %p176
        %p329 = scmp.lt.s32.totalorder %s26, 1
        %s330 = scalar_select %p329, %s26, 1
        %s331 = scalar_lea.vmem %s5, %s330
        %p332 = scmp.lt.s32.totalorder %s26, 1
        %s333 = scalar_select %p332, %s26, 1
        %s334 = scalar_lea.vmem %s5, %s333
        %v335 = vld [vmem:[%s276] sm:$0xf]
        %v336 = vld [vmem:[%s286] sm:$0xf]
        %v337 = vld [vmem:[%s296] sm:$0xf]
        %339 = vset.pattern.permute.xlu0 0
        %340 = vperm.xlu0 %339, %v337
        %v341 = vpop.permute.xlu0 %340
        %v343 = vmul.f32 %v341, %v335
        %344 = vset.pattern.permute.xlu0 1
        %345 = vperm.xlu0 %344, %v337
        %v346 = vpop.permute.xlu0 %345
        %v348 = vmul.f32 %v346, %v336
        %v349 = vadd.f32 %v343, %v348
        %350 = vset.pattern.permute.xlu0 2
        %351 = vperm.xlu0 %350, %v337
        %v352 = vpop.permute.xlu0 %351
        %v354 = vadd.f32 %v349, %v352
        %v355 = vld [vmem:[%s3] sm:$0xf]
        %v356 = vld [vmem:[%s4] sm:$0xf]
        %357 = vrot.lane.b32.xlu0 %v337, 125
        %v358 = vpop.permute.xlu0 %357
        %v360 = vadd.f32 %v356, %v358
        %362 = vset.pattern.permute.xlu0 0
        %363 = vperm.xlu0 %362, %v360
        %v364 = vpop.permute.xlu0 %363
        %v366 = vsub.f32 %v364, %v336
        %368 = vset.pattern.permute.xlu0 0
        %369 = vperm.xlu0 %368, %v355
        %v370 = vpop.permute.xlu0 %369
        %v372 = vperm.slane %v354, 0
        %v373 = vmul.f32 %v370, %v372
        %v374 = vadd.f32 %v366, %v373
        %375 = vset.pattern.permute.xlu0 1
        %376 = vperm.xlu0 %375, %v355
        %v377 = vpop.permute.xlu0 %376
        %v379 = vperm.slane %v354, 1
        %v380 = vmul.f32 %v377, %v379
        %v381 = vadd.f32 %v374, %v380
        %382 = vset.pattern.permute.xlu0 2
        %383 = vperm.xlu0 %382, %v355
        %v384 = vpop.permute.xlu0 %383
        %v386 = vperm.slane %v354, 2
        %v387 = vmul.f32 %v384, %v386
        %v388 = vadd.f32 %v381, %v387
        %389 = vset.pattern.permute.xlu0 3
        %390 = vperm.xlu0 %389, %v355
        %v391 = vpop.permute.xlu0 %390
        %v393 = vperm.slane %v354, 3
        %v394 = vmul.f32 %v391, %v393
        %v395 = vadd.f32 %v388, %v394
        %v396 = vand.u32 2147483647, %v395
        %vm397 = vcmask 1043456
        %v398 = vsel %vm397, %v396, 0.0
        %399 = vadd.xlane.f32.xlu0 %v398
        %v400 = vpop.xlane.xlu0 %399
        %v401 = vrot.slane %v400, 4
        %v402 = vadd.f32 %v400, %v401
        %v403 = vrot.slane %v402, 2
        %v404 = vadd.f32 %v402, %v403
        %v405 = vrot.slane %v404, 1
        %v406 = vadd.f32 %v404, %v405
        %s407 = vtos %v406
        %v408 = vstv %s407
        %p409 = scmp.eq.s32.totalorder %s27, 0
        // Predicated region
        $region53: #{tpu_custom_call.1} parent=39 // pred_check
          %p410 = pneg %p409
        $region54: #{tpu_custom_call.1} parent=39 // pred_check_branch
          %412 = sbr.rel (%p410) target = $region56
        $region55: #{tpu_custom_call.1} parent=39 // pred_region
          %vm413 = vcmask 0
          %414 = vst.msk [vmem:[%s334] sm:$0x1] %vm413, 0.0
        $region56: #{tpu_custom_call.1} parent=39 // pred_fallthru
          _
        %v415 = vld [vmem:[%s334] sm:$0x1]
        %v416 = vadd.f32 %v415, %v408
        %vm417 = vcmask 0
        %418 = vst.msk [vmem:[%s334] sm:$0x1] %vm417, %v416
        %p419 = scmp.eq.s32.totalorder %s27, 1
        // Predicated region
        $region57: #{tpu_custom_call.1} parent=39 // pred_check
          %p420 = pneg %p419
        $region58: #{tpu_custom_call.1} parent=39 // pred_check_branch
          %422 = sbr.rel (%p420) target = $region60
        $region59: #{tpu_custom_call.1} parent=39 // pred_region
          %v423 = vld [vmem:[%s334] sm:$0x1]
          %v424 = vmul.f32 %v423, 0.0009765625
          %425 = vst.msk [vmem:[%s334] sm:$0x1] %vm417, %v424
        $region60: #{tpu_custom_call.1} parent=39 // pred_fallthru
          _
        %p426 = scmp.lt.s32.totalorder %s26, 1
        %s427 = scalar_select %p426, %s26, 1
        %s428 = scalar_lea.vmem %s5, %s427
        // Predicated region
        $region61: #{tpu_custom_call.1} parent=39 // pred_check
          %p429 = pneg %p176
        $region62: #{tpu_custom_call.1} parent=39 // pred_check_branch
          %431 = sbr.rel (%p429) target = $region64
        $region63: #{tpu_custom_call.1} parent=39 // pred_region
          _
        $region64: #{tpu_custom_call.1} parent=39 // pred_fallthru
          _
      $region40: #{tpu_custom_call.1} parent=5 // pred_fallthru
        _
      %p432 = scmp.le.s32.totalorder 2, %s17
      // Predicated region
      $region65: #{tpu_custom_call.1} parent=5 // pred_check
        %p433 = pneg %p432
      $region66: #{tpu_custom_call.1} parent=5 // pred_check_branch
        %435 = sbr.rel (%p433) target = $region68
      $region67: #{tpu_custom_call.1} parent=5 // pred_region
        %s436 = ssub.s32 %s17, 2
        // Predicated region
        $region69: #{tpu_custom_call.1} parent=67 // pred_check
          %p437 = pneg %p182
        $region70: #{tpu_custom_call.1} parent=67 // pred_check_branch
          %439 = sbr.rel (%p437) target = $region72
        $region71: #{tpu_custom_call.1} parent=67 // pred_region
          %p440 = scmp.lt.s32.totalorder %s28, 1
          %s441 = scalar_select %p440, %s28, 1
          %s442 = scalar_lea.vmem %s5, %s441
        $region72: #{tpu_custom_call.1} parent=67 // pred_fallthru
          _
      $region68: #{tpu_custom_call.1} parent=5 // pred_fallthru
        _
    $region6: #{tpu_custom_call.1} parent=1 // loop_footer
      %s21 = sadd.s32 1, %s17
    $region7: #{tpu_custom_call.1} parent=1 // loop_footer_branch
      %16 = sbr.rel target = $region3
    $region8: #{tpu_custom_call.1} parent=1 // loop_exit
      _
    %443 = vsyncpa [#allocation3], 1
    %s444 = scalar_lea.sflag [#allocation3], 1
    %445 = vsyncpa %s444, 1
    %446 = vsyncpa [#allocation5], 1
    %s447 = scalar_lea.sflag [#allocation5], 1
    %448 = vsyncpa %s447, 1

</llo_original>
